<compile_context>
chip_gen: v7x
topology: tpu7x:2x2x1
jax: 0.10.0
libtpu: 0.0.40
codegen_flags: <defaults>
</compile_context>

<pallas_src>
import jax
import jax.numpy as jnp
from jax.experimental import pallas as pl
from jax.experimental.pallas import tpu as pltpu


def _copy_kernel(x_ref, o_ref):
    o_ref[...] = x_ref[...]


def _resolve_shape(shape, numel):
    """torch.Tensor.view-style shape resolution (supports a single -1)."""
    shape = tuple(int(s) for s in shape)
    if shape.count(-1) > 1:
        raise ValueError("only one dimension may be -1")
    if -1 in shape:
        idx = shape.index(-1)
        rest = 1
        for j, s in enumerate(shape):
            if j != idx:
                rest *= s
        if rest == 0 or numel % rest != 0:
            raise ValueError(f"cannot reshape {numel} elements into {shape}")
        shape = shape[:idx] + (numel // rest,) + shape[idx + 1:]
    total = 1
    for s in shape:
        total *= s
    if total != numel:
        raise ValueError(f"cannot reshape {numel} elements into {shape}")
    return shape


def _choose_tiling(numel, itemsize):
    """Pick a lane-dense 2-D factorization (rows, lanes) and a row tile.

    `lanes` is a multiple of 128 whenever possible (unmasked lane-dense stores); the
    row tile is the largest power of two <= ~4 MiB per block buffer that divides
    `rows`, so no padding / tail-block masking is ever needed.
    """
    for lanes in (2048, 1024, 512, 256, 128):
        if numel % lanes == 0:
            rows = numel // lanes
            max_rows = max(8, (4 * 1024 * 1024) // (lanes * itemsize))
            row_tile = rows  # full-extent fallback (small or awkward row counts)
            for t in (1024, 512, 256, 128, 64, 32, 16, 8):
                if t <= max_rows and rows % t == 0:
                    row_tile = t
                    break
            return rows, lanes, row_tile
    # numel not a multiple of 128: single full-extent block (block == array dims).
    # TODO(synk): very large tensors whose element count is not a multiple of 128 would
    # need a masked tail block; not required for this module's shapes.
    return 1, numel, 1


def pallas_reshape(x, shape):
    """Equivalent of torch `x.view(*shape)` on a contiguous tensor."""
    numel = x.size
    target = _resolve_shape(shape, numel)
    rows, lanes, row_tile = _choose_tiling(numel, x.dtype.itemsize)

    # Wrapper-side reshape of a contiguous array is pure layout metadata (no compute);
    # the kernel does the actual (mem-bound) materialization as a lane-dense tiled copy.
    x2d = x.reshape(rows, lanes)

    out2d = pl.pallas_call(
        _copy_kernel,
        out_shape=jax.ShapeDtypeStruct((rows, lanes), x.dtype),
        grid_spec=pltpu.PrefetchScalarGridSpec(
            num_scalar_prefetch=0,
            grid=(rows // row_tile,),
            in_specs=[pl.BlockSpec((row_tile, lanes), lambda i: (i, 0))],
            out_specs=pl.BlockSpec((row_tile, lanes), lambda i: (i, 0)),
        ),
        compiler_params=pltpu.CompilerParams(
            dimension_semantics=("parallel",),
            vmem_limit_bytes=48 * 1024 * 1024,
        ),
    )(x2d)
    return out2d.reshape(target)


if __name__ == "__main__":
    key = jax.random.PRNGKey(0)
    # Small shapes consistent with the module: Reshape(2, -1) applied to a
    # (2, 4, 16, 16) activation, i.e. flatten everything but the batch dimension.
    x = jax.random.normal(key, (2, 4, 16, 16), jnp.float32)

    reshape_fn = jax.jit(lambda v: pallas_reshape(v, (2, -1)))
    out = jax.block_until_ready(reshape_fn(x))

    assert out.shape == (2, 1024), out.shape
    assert bool(jnp.array_equal(out, jnp.reshape(x, (2, 1024)))), "mismatch vs reference"

    # Second call exercising the multi-row tiled path (still small).
    x2 = jax.random.normal(jax.random.PRNGKey(1), (4, 8, 16, 32), jnp.float32)
    out2 = jax.block_until_ready(jax.jit(lambda v: pallas_reshape(v, (-1, 128)))(x2))
    assert out2.shape == (128, 128), out2.shape
    assert bool(jnp.array_equal(out2, jnp.reshape(x2, (128, 128)))), "mismatch vs reference"

    print("KERNEL_OK")
</pallas_src>

<mosaic_0001>
module attributes {stable_mosaic.version = 11 : i64} {
  func.func @_copy_kernel(%arg0: i32, %arg1: memref<1x2048xf32, #tpu.memory_space<vmem>>, %arg2: memref<1x2048xf32, #tpu.memory_space<vmem>>) attributes {dimension_semantics = [#tpu.dimension_semantics<parallel>], iteration_bounds = array<i64: 1>, scalar_prefetch = 0 : i64, scratch_operands = 0 : i64, tpu.core_type = #tpu.core_type<tc>, window_params = [{transform_indices = @transform_0, window_bounds = array<i64: 1, 2048>}, {transform_indices = @transform_1, window_bounds = array<i64: 1, 2048>}]} {
    %c0 = arith.constant 0 : index
    %c0_0 = arith.constant 0 : index
    %0 = vector.load %arg1[%c0, %c0_0] : memref<1x2048xf32, #tpu.memory_space<vmem>>, vector<1x2048xf32>
    %c0_1 = arith.constant 0 : index
    %c0_2 = arith.constant 0 : index
    %1 = vector.load %arg2[%c0_1, %c0_2] : memref<1x2048xf32, #tpu.memory_space<vmem>>, vector<1x2048xf32>
    tpu.vector_store %arg2[%c0_1, %c0_2], %0 {strides = array<i32>} : memref<1x2048xf32, #tpu.memory_space<vmem>>, vector<1x2048xf32>,
    return
  }
  func.func @transform_0(%arg0: i32) -> (i32, i32) {
    %c0_i32 = arith.constant 0 : i32
    %c0_i32_0 = arith.constant 0 : i32
    return %arg0, %c0_i32 : i32, i32
  }
  func.func @transform_1(%arg0: i32) -> (i32, i32) {
    %c0_i32 = arith.constant 0 : i32
    %c0_i32_0 = arith.constant 0 : i32
    return %arg0, %c0_i32 : i32, i32
  }
}

</mosaic_0001>

<llo_original>
// kernel: _lambda_.1
$region0: #{_lambda_.1}
  #allocation0 [shape = 'u32[]', space=smem, size = 0x4, offset = 0x4, fixed_abs, tag = 'smem constant byte address 0x4 - core index']
  #allocation1 [shape = 'u32[144,128]{1,0:T(1,128)}', space=vmem, size = 0x12000, scoped, tag = 'internal scratch']
  %s0 = inlined_call_operand.vmem [shape: f32[1,2048], index: 0, kind: input, shape index: {}]
  %s1 = inlined_call_operand.vmem [shape: f32[1,2048], index: 1, kind: output, shape index: {}]
  %s2 = sld [smem:[#allocation0]]
  $region14: #{_lambda_.1} parent=0
    _
  %s4 = ssub.s32 1, %s2
  %s5 = scalar_select 0, %s4, %s2
  // Predicated region
  $region2: #{_lambda_.1} parent=0 // pred_check
    _
  $region3: #{_lambda_.1} parent=0 // pred_check_branch
    %7 = sbr.rel (0) target = $region5
  $region4: #{_lambda_.1} parent=0 // pred_region
    _
  $region5: #{_lambda_.1} parent=0 // pred_fallthru
    _
  %v8 = vld [vmem:[%s0] sm:$0xff]
  %v9 = vld [vmem:[%s0 + $0x8] sm:$0xff]
  %10 = vst [vmem:[%s1] sm:$0xff] %v8
  %11 = vst [vmem:[%s1 + $0x8] sm:$0xff] %v9
  // Predicated region
  $region6: #{_lambda_.1} parent=0 // pred_check
    _
  $region7: #{_lambda_.1} parent=0 // pred_check_branch
    %13 = sbr.rel (0) target = $region9
  $region8: #{_lambda_.1} parent=0 // pred_region
    _
  $region9: #{_lambda_.1} parent=0 // pred_fallthru
    _
  // Predicated region
  $region10: #{_lambda_.1} parent=0 // pred_check
    _
  $region11: #{_lambda_.1} parent=0 // pred_check_branch
    %15 = sbr.rel (0) target = $region13
  $region12: #{_lambda_.1} parent=0 // pred_region
    _
  $region13: #{_lambda_.1} parent=0 // pred_fallthru
    _

</llo_original>
